<compile_context>
chip_gen: v7x
topology: tpu7x:2x2x1
jax: 0.10.0
libtpu: 0.0.40
codegen_flags: <defaults>
</compile_context>

<pallas_src>
import jax
import jax.numpy as jnp
from jax.experimental import pallas as pl
from jax.experimental.pallas import tpu as pltpu

LANES = 128
_F32 = jnp.float32


def _sublane_pack(dtype) -> int:
    """Packed-sublane multiple for a dtype: 8 (32-bit), 16 (16-bit), 32 (8-bit)."""
    itemsize = jnp.dtype(dtype).itemsize
    return max(8, 32 // max(1, itemsize))


def _as_2d(t):
    """Reshape to 2-D without changing element order (metadata-only for contiguous arrays)."""
    if t.ndim >= 2:
        return t.reshape(-1, t.shape[-1])
    flat = t.reshape(-1)
    if flat.size >= LANES and flat.size % LANES == 0:
        return flat.reshape(-1, LANES)
    return flat.reshape(1, -1)


def _make_kernel(metas, grid_size):
    """metas: per-tensor (start_step, num_blocks, tile_rows, total_rows)."""
    n = len(metas)

    def kernel(*refs):
        weight_ref = refs[0]              # (1,) f32 in SMEM
        x_refs = refs[1:1 + n]            # one VMEM tile per tensor
        out_ref = refs[1 + n]             # (1, 1) f32
        acc_ref = refs[2 + n]             # (ACC_ROWS, 128) f32 scratch, carried

        i = pl.program_id(0)

        @pl.when(i == 0)
        def _init():
            acc_ref[...] = jnp.zeros_like(acc_ref)

        rows = jax.lax.broadcasted_iota(jnp.int32, acc_ref.shape, 0)
        lanes = jax.lax.broadcasted_iota(jnp.int32, acc_ref.shape, 1)

        for j, (start, nblk, tile_rows, total_rows) in enumerate(metas):

            @pl.when((i >= start) & (i < start + nblk))
            def _accumulate(j=j, start=start, tile_rows=tile_rows,
                            total_rows=total_rows):
                x = x_refs[j][...].astype(_F32)
                if total_rows % tile_rows != 0:
                    # Ragged last tile: the out-of-bounds rows of an edge block have
                    # unspecified contents -> mask them before squaring.
                    valid = jnp.minimum(total_rows - (i - start) * tile_rows, tile_rows)
                    row_ids = jax.lax.broadcasted_iota(jnp.int32, x.shape, 0)
                    x = jnp.where(row_ids < valid, x, 0.0)
                partial = jnp.sum(x * x)                              # f32 scalar
                onehot = (rows == j) & (lanes == 0)
                acc_ref[...] += jnp.where(onehot, partial, 0.0)       # scatter to row j

        @pl.when(i == grid_size - 1)
        def _finalize():
            ssq = jnp.sum(acc_ref[...], axis=1, keepdims=True)        # (ACC_ROWS, 1)
            norms = jnp.sqrt(ssq)                                     # unused rows stay 0
            out_ref[...] = weight_ref[0] * jnp.sum(norms, keepdims=True)

    return kernel


def l2_regularizer(tensors, weight, *, tile_target_bytes=None):
    """Pallas equivalent of L2(weight).forward(tuples): weight * sum_f ||f||_2."""
    tensors = [jnp.asarray(t) for t in tensors]
    tensors = [t for t in tensors if t.size > 0]
    n = len(tensors)

    weight_arr = jnp.asarray(weight, dtype=_F32).reshape(1)
    if n == 0:
        return (weight_arr * 0.0)[0]

    mats = [_as_2d(t) for t in tensors]

    # Per-tensor VMEM tile budget (each input is double-buffered): keep the pipeline
    # comfortably inside the default scoped-VMEM limit on v5e/v6e/v7x.
    if tile_target_bytes is None:
        tile_target_bytes = min(1 << 20, max(128 << 10, (8 << 20) // (2 * n)))

    metas = []
    in_specs = [pl.BlockSpec(memory_space=pltpu.MemorySpace.SMEM)]    # weight scalar
    start = 0
    for m in mats:
        rows_total, cols = m.shape
        pack = _sublane_pack(m.dtype)
        row_bytes = ((cols + LANES - 1) // LANES) * LANES * jnp.dtype(m.dtype).itemsize
        tile_rows = max(pack, (tile_target_bytes // max(1, row_bytes)) // pack * pack)
        if tile_rows >= rows_total:
            tile_rows = rows_total            # full extent is always a legal block dim
        # TODO(synk): a single full-width row larger than the VMEM budget (huge last
        # dim) is not re-tiled along lanes; typical L2 factor shapes never hit this.
        nblk = (rows_total + tile_rows - 1) // tile_rows
        metas.append((start, nblk, tile_rows, rows_total))

        def index_map(i, _start=start, _nblk=nblk):
            # Hold (clamp) the block index outside this tensor's step range so the
            # pipeliner issues no redundant copies; advance 0..nblk-1 inside it.
            return (jnp.minimum(jnp.maximum(i - _start, 0), _nblk - 1), 0)

        in_specs.append(pl.BlockSpec((tile_rows, cols), index_map))
        start += nblk

    grid_size = start
    acc_rows = max(8, ((n + 7) // 8) * 8)

    out = pl.pallas_call(
        _make_kernel(metas, grid_size),
        out_shape=jax.ShapeDtypeStruct((1, 1), _F32),
        grid=(grid_size,),
        in_specs=in_specs,
        out_specs=pl.BlockSpec((1, 1), lambda i: (0, 0)),
        scratch_shapes=[pltpu.VMEM((acc_rows, LANES), _F32)],
        compiler_params=pltpu.CompilerParams(
            dimension_semantics=("arbitrary",),       # carried accumulator
            vmem_limit_bytes=32 * 1024 * 1024,
        ),
    )(weight_arr, *mats)
    return out[0, 0]


def _l2_reference(tensors, weight):
    total = jnp.float32(0.0)
    for t in tensors:
        f = jnp.asarray(t).astype(jnp.float32)
        total = total + jnp.sqrt(jnp.sum(f * f))
    return jnp.float32(weight) * total


if __name__ == "__main__":
    key = jax.random.PRNGKey(0)
    k1, k2, k3 = jax.random.split(key, 3)
    # Small factor-style tensors (as typically fed to the L2 regularizer), mixed shapes/dtypes.
    lhs = jax.random.normal(k1, (20, 128), dtype=jnp.float32)         # multi-tile + ragged tail
    rel = jax.random.normal(k2, (8, 32), dtype=jnp.float32)           # single tile, narrow lanes
    rhs = jax.random.normal(k3, (16, 48), dtype=jnp.bfloat16)         # native bf16 streaming
    weight = 0.05

    # Force tiny tiles so the multi-tile / tail-mask path is exercised at small shapes.
    out = l2_regularizer((lhs, rel, rhs), weight, tile_target_bytes=4096)
    jax.block_until_ready(out)

    ref = _l2_reference((lhs, rel, rhs), weight)
    assert out.shape == ()
    assert jnp.allclose(out, ref, atol=1e-4, rtol=1e-4), (out, ref)

    print("KERNEL_OK")
</pallas_src>

<mosaic_0001>
module attributes {stable_mosaic.version = 11 : i64} {
  func.func @kernel(%arg0: i32, %arg1: memref<1xf32, #tpu.memory_space<smem>>, %arg2: memref<8x128xf32, #tpu.memory_space<vmem>>, %arg3: memref<8x32xf32, #tpu.memory_space<vmem>>, %arg4: memref<16x48xbf16, #tpu.memory_space<vmem>>, %arg5: memref<1x1xf32, #tpu.memory_space<vmem>>, %arg6: memref<8x128xf32, #tpu.memory_space<vmem>>) attributes {dimension_semantics = [#tpu.dimension_semantics<arbitrary>], iteration_bounds = array<i64: 5>, scalar_prefetch = 0 : i64, scratch_operands = 1 : i64, tpu.core_type = #tpu.core_type<tc>, window_params = [{transform_indices = @transform_0, window_bounds = array<i64: 1>}, {transform_indices = @transform_1, window_bounds = array<i64: 8, 128>}, {transform_indices = @transform_2, window_bounds = array<i64: 8, 32>}, {transform_indices = @transform_3, window_bounds = array<i64: 16, 48>}, {pipeline_mode = #tpu.pipeline_mode<synchronous>, transform_indices = @transform_4, window_bounds = array<i64: 1, 1>}]} {
    %c0_i32 = arith.constant 0 : i32
    %0 = arith.cmpi eq, %arg0, %c0_i32 : i32
    %1 = arith.extui %0 : i1 to i32
    %c0_i32_0 = arith.constant 0 : i32
    %2 = arith.cmpi ne, %1, %c0_i32_0 : i32
    scf.if %2 {
      %cst = arith.constant 0.000000e+00 : f32
      %23 = vector.broadcast %cst : f32 to vector<8x128xf32>
      %c0 = arith.constant 0 : index
      %c0_9 = arith.constant 0 : index
      %24 = vector.load %arg6[%c0, %c0_9] : memref<8x128xf32, #tpu.memory_space<vmem>>, vector<8x128xf32>
      tpu.vector_store %arg6[%c0, %c0_9], %23 {strides = array<i32>} : memref<8x128xf32, #tpu.memory_space<vmem>>, vector<8x128xf32>,
    } else {
    }
    %3 = tpu.iota {dimensions = array<i32: 0>} : vector<8x128xi32>
    %4 = tpu.iota {dimensions = array<i32: 1>} : vector<8x128xi32>
    %c0_i32_1 = arith.constant 0 : i32
    %5 = arith.cmpi sge, %arg0, %c0_i32_1 : i32
    %c3_i32 = arith.constant 3 : i32
    %6 = arith.cmpi slt, %arg0, %c3_i32 : i32
    %7 = arith.andi %5, %6 : i1
    %8 = arith.extui %7 : i1 to i32
    %c0_i32_2 = arith.constant 0 : i32
    %9 = arith.cmpi ne, %8, %c0_i32_2 : i32
    scf.if %9 {
      %c0 = arith.constant 0 : index
      %c0_9 = arith.constant 0 : index
      %23 = vector.load %arg2[%c0, %c0_9] : memref<8x128xf32, #tpu.memory_space<vmem>>, vector<8x128xf32>
      %c0_i32_10 = arith.constant 0 : i32
      %24 = arith.subi %arg0, %c0_i32_10 : i32
      %c8_i32 = arith.constant 8 : i32
      %25 = arith.muli %24, %c8_i32 : i32
      %c20_i32 = arith.constant 20 : i32
      %26 = arith.subi %c20_i32, %25 : i32
      %c8_i32_11 = arith.constant 8 : i32
      %27 = arith.minsi %26, %c8_i32_11 : i32
      %28 = tpu.iota {dimensions = array<i32: 0>} : vector<8x128xi32>
      %29 = vector.broadcast %27 : i32 to vector<8x128xi32>
      %30 = arith.cmpi slt, %28, %29 : vector<8x128xi32>
      %cst = arith.constant 0.000000e+00 : f32
      %31 = vector.broadcast %cst : f32 to vector<8x128xf32>
      %32 = arith.select %30, %23, %31 : vector<8x128xi1>, vector<8x128xf32>
      %33 = arith.mulf %32, %32 : vector<8x128xf32>
      %34 = vector.shape_cast %33 : vector<8x128xf32> to vector<1x8x128xf32>
      %cst_12 = arith.constant dense<0.000000e+00> : vector<1xf32>
      %35 = vector.multi_reduction <add>, %34, %cst_12 [1, 2] : vector<1x8x128xf32> to vector<1xf32>
      %36 = vector.shape_cast %35 : vector<1xf32> to vector<1x1x1xf32>
      %37 = vector.extract %36[0, 0, 0] : f32 from vector<1x1x1xf32>
      %c0_i32_13 = arith.constant 0 : i32
      %38 = vector.broadcast %c0_i32_13 : i32 to vector<8x128xi32>
      %39 = arith.cmpi eq, %3, %38 : vector<8x128xi32>
      %c0_i32_14 = arith.constant 0 : i32
      %40 = vector.broadcast %c0_i32_14 : i32 to vector<8x128xi32>
      %41 = arith.cmpi eq, %4, %40 : vector<8x128xi32>
      %42 = arith.andi %39, %41 : vector<8x128xi1>
      %c0_15 = arith.constant 0 : index
      %c0_16 = arith.constant 0 : index
      %43 = vector.load %arg6[%c0_15, %c0_16] : memref<8x128xf32, #tpu.memory_space<vmem>>, vector<8x128xf32>
      %cst_17 = arith.constant 0.000000e+00 : f32
      %44 = vector.broadcast %37 : f32 to vector<8x128xf32>
      %45 = vector.broadcast %cst_17 : f32 to vector<8x128xf32>
      %46 = arith.select %42, %44, %45 : vector<8x128xi1>, vector<8x128xf32>
      %47 = arith.addf %43, %46 : vector<8x128xf32>
      %c0_18 = arith.constant 0 : index
      %c0_19 = arith.constant 0 : index
      %48 = vector.load %arg6[%c0_18, %c0_19] : memref<8x128xf32, #tpu.memory_space<vmem>>, vector<8x128xf32>
      tpu.vector_store %arg6[%c0_18, %c0_19], %47 {strides = array<i32>} : memref<8x128xf32, #tpu.memory_space<vmem>>, vector<8x128xf32>,
    } else {
    }
    %c3_i32_3 = arith.constant 3 : i32
    %10 = arith.cmpi sge, %arg0, %c3_i32_3 : i32
    %c4_i32 = arith.constant 4 : i32
    %11 = arith.cmpi slt, %arg0, %c4_i32 : i32
    %12 = arith.andi %10, %11 : i1
    %13 = arith.extui %12 : i1 to i32
    %c0_i32_4 = arith.constant 0 : i32
    %14 = arith.cmpi ne, %13, %c0_i32_4 : i32
    scf.if %14 {
      %c0 = arith.constant 0 : index
      %c0_9 = arith.constant 0 : index
      %23 = vector.load %arg3[%c0, %c0_9] : memref<8x32xf32, #tpu.memory_space<vmem>>, vector<8x32xf32>
      %24 = arith.mulf %23, %23 : vector<8x32xf32>
      %25 = vector.shape_cast %24 : vector<8x32xf32> to vector<1x8x32xf32>
      %cst = arith.constant dense<0.000000e+00> : vector<1xf32>
      %26 = vector.multi_reduction <add>, %25, %cst [1, 2] : vector<1x8x32xf32> to vector<1xf32>
      %27 = vector.shape_cast %26 : vector<1xf32> to vector<1x1x1xf32>
      %28 = vector.extract %27[0, 0, 0] : f32 from vector<1x1x1xf32>
      %c1_i32 = arith.constant 1 : i32
      %29 = vector.broadcast %c1_i32 : i32 to vector<8x128xi32>
      %30 = arith.cmpi eq, %3, %29 : vector<8x128xi32>
      %c0_i32_10 = arith.constant 0 : i32
      %31 = vector.broadcast %c0_i32_10 : i32 to vector<8x128xi32>
      %32 = arith.cmpi eq, %4, %31 : vector<8x128xi32>
      %33 = arith.andi %30, %32 : vector<8x128xi1>
      %c0_11 = arith.constant 0 : index
      %c0_12 = arith.constant 0 : index
      %34 = vector.load %arg6[%c0_11, %c0_12] : memref<8x128xf32, #tpu.memory_space<vmem>>, vector<8x128xf32>
      %cst_13 = arith.constant 0.000000e+00 : f32
      %35 = vector.broadcast %28 : f32 to vector<8x128xf32>
      %36 = vector.broadcast %cst_13 : f32 to vector<8x128xf32>
      %37 = arith.select %33, %35, %36 : vector<8x128xi1>, vector<8x128xf32>
      %38 = arith.addf %34, %37 : vector<8x128xf32>
      %c0_14 = arith.constant 0 : index
      %c0_15 = arith.constant 0 : index
      %39 = vector.load %arg6[%c0_14, %c0_15] : memref<8x128xf32, #tpu.memory_space<vmem>>, vector<8x128xf32>
      tpu.vector_store %arg6[%c0_14, %c0_15], %38 {strides = array<i32>} : memref<8x128xf32, #tpu.memory_space<vmem>>, vector<8x128xf32>,
    } else {
    }
    %c4_i32_5 = arith.constant 4 : i32
    %15 = arith.cmpi sge, %arg0, %c4_i32_5 : i32
    %c5_i32 = arith.constant 5 : i32
    %16 = arith.cmpi slt, %arg0, %c5_i32 : i32
    %17 = arith.andi %15, %16 : i1
    %18 = arith.extui %17 : i1 to i32
    %c0_i32_6 = arith.constant 0 : i32
    %19 = arith.cmpi ne, %18, %c0_i32_6 : i32
    scf.if %19 {
      %c0 = arith.constant 0 : index
      %c0_9 = arith.constant 0 : index
      %23 = vector.load %arg4[%c0, %c0_9] : memref<16x48xbf16, #tpu.memory_space<vmem>>, vector<16x48xbf16>
      %24 = arith.extf %23 : vector<16x48xbf16> to vector<16x48xf32>
      %25 = arith.mulf %24, %24 : vector<16x48xf32>
      %26 = vector.shape_cast %25 : vector<16x48xf32> to vector<1x16x48xf32>
      %cst = arith.constant dense<0.000000e+00> : vector<1xf32>
      %27 = vector.multi_reduction <add>, %26, %cst [1, 2] : vector<1x16x48xf32> to vector<1xf32>
      %28 = vector.shape_cast %27 : vector<1xf32> to vector<1x1x1xf32>
      %29 = vector.extract %28[0, 0, 0] : f32 from vector<1x1x1xf32>
      %c2_i32 = arith.constant 2 : i32
      %30 = vector.broadcast %c2_i32 : i32 to vector<8x128xi32>
      %31 = arith.cmpi eq, %3, %30 : vector<8x128xi32>
      %c0_i32_10 = arith.constant 0 : i32
      %32 = vector.broadcast %c0_i32_10 : i32 to vector<8x128xi32>
      %33 = arith.cmpi eq, %4, %32 : vector<8x128xi32>
      %34 = arith.andi %31, %33 : vector<8x128xi1>
      %c0_11 = arith.constant 0 : index
      %c0_12 = arith.constant 0 : index
      %35 = vector.load %arg6[%c0_11, %c0_12] : memref<8x128xf32, #tpu.memory_space<vmem>>, vector<8x128xf32>
      %cst_13 = arith.constant 0.000000e+00 : f32
      %36 = vector.broadcast %29 : f32 to vector<8x128xf32>
      %37 = vector.broadcast %cst_13 : f32 to vector<8x128xf32>
      %38 = arith.select %34, %36, %37 : vector<8x128xi1>, vector<8x128xf32>
      %39 = arith.addf %35, %38 : vector<8x128xf32>
      %c0_14 = arith.constant 0 : index
      %c0_15 = arith.constant 0 : index
      %40 = vector.load %arg6[%c0_14, %c0_15] : memref<8x128xf32, #tpu.memory_space<vmem>>, vector<8x128xf32>
      tpu.vector_store %arg6[%c0_14, %c0_15], %39 {strides = array<i32>} : memref<8x128xf32, #tpu.memory_space<vmem>>, vector<8x128xf32>,
    } else {
    }
    %c4_i32_7 = arith.constant 4 : i32
    %20 = arith.cmpi eq, %arg0, %c4_i32_7 : i32
    %21 = arith.extui %20 : i1 to i32
    %c0_i32_8 = arith.constant 0 : i32
    %22 = arith.cmpi ne, %21, %c0_i32_8 : i32
    scf.if %22 {
      %c0 = arith.constant 0 : index
      %c0_9 = arith.constant 0 : index
      %23 = vector.load %arg6[%c0, %c0_9] : memref<8x128xf32, #tpu.memory_space<vmem>>, vector<8x128xf32>
      %cst = arith.constant dense<0.000000e+00> : vector<8xf32>
      %24 = vector.multi_reduction <add>, %23, %cst [1] : vector<8x128xf32> to vector<8xf32>
      %25 = vector.shape_cast %24 : vector<8xf32> to vector<8x1xf32>
      %26 = math.sqrt %25 : vector<8x1xf32>
      %c0_10 = arith.constant 0 : index
      %27 = memref.load %arg1[%c0_10] : memref<1xf32, #tpu.memory_space<smem>>
      %28 = vector.shape_cast %26 : vector<8x1xf32> to vector<1x8x1xf32>
      %cst_11 = arith.constant dense<0.000000e+00> : vector<1xf32>
      %29 = vector.multi_reduction <add>, %28, %cst_11 [1, 2] : vector<1x8x1xf32> to vector<1xf32>
      %30 = vector.shape_cast %29 : vector<1xf32> to vector<1x1x1xf32>
      %31 = vector.extract %30[0, 0, 0] : f32 from vector<1x1x1xf32>
      %32 = vector.broadcast %31 : f32 to vector<1x1xf32>
      %33 = vector.broadcast %27 : f32 to vector<1x1xf32>
      %34 = arith.mulf %33, %32 : vector<1x1xf32>
      %c0_12 = arith.constant 0 : index
      %c0_13 = arith.constant 0 : index
      %35 = vector.load %arg5[%c0_12, %c0_13] : memref<1x1xf32, #tpu.memory_space<vmem>>, vector<1x1xf32>
      tpu.vector_store %arg5[%c0_12, %c0_13], %34 {strides = array<i32>} : memref<1x1xf32, #tpu.memory_space<vmem>>, vector<1x1xf32>,
    } else {
    }
    return
  }
  func.func @transform_0(%arg0: i32) -> i32 {
    %c0_i32 = arith.constant 0 : i32
    %c0_i32_0 = arith.constant 0 : i32
    return %c0_i32 : i32
  }
  func.func @transform_1(%arg0: i32) -> (i32, i32) {
    %c0_i32 = arith.constant 0 : i32
    %0 = arith.subi %arg0, %c0_i32 : i32
    %c0_i32_0 = arith.constant 0 : i32
    %1 = arith.maxsi %0, %c0_i32_0 : i32
    %c2_i32 = arith.constant 2 : i32
    %2 = arith.minsi %1, %c2_i32 : i32
    %c0_i32_1 = arith.constant 0 : i32
    %c0_i32_2 = arith.constant 0 : i32
    return %2, %c0_i32_1 : i32, i32
  }
  func.func @transform_2(%arg0: i32) -> (i32, i32) {
    %c3_i32 = arith.constant 3 : i32
    %0 = arith.subi %arg0, %c3_i32 : i32
    %c0_i32 = arith.constant 0 : i32
    %1 = arith.maxsi %0, %c0_i32 : i32
    %c0_i32_0 = arith.constant 0 : i32
    %2 = arith.minsi %1, %c0_i32_0 : i32
    %c0_i32_1 = arith.constant 0 : i32
    %c0_i32_2 = arith.constant 0 : i32
    return %2, %c0_i32_1 : i32, i32
  }
  func.func @transform_3(%arg0: i32) -> (i32, i32) {
    %c4_i32 = arith.constant 4 : i32
    %0 = arith.subi %arg0, %c4_i32 : i32
    %c0_i32 = arith.constant 0 : i32
    %1 = arith.maxsi %0, %c0_i32 : i32
    %c0_i32_0 = arith.constant 0 : i32
    %2 = arith.minsi %1, %c0_i32_0 : i32
    %c0_i32_1 = arith.constant 0 : i32
    %c0_i32_2 = arith.constant 0 : i32
    return %2, %c0_i32_1 : i32, i32
  }
  func.func @transform_4(%arg0: i32) -> (i32, i32) {
    %c0_i32 = arith.constant 0 : i32
    %c0_i32_0 = arith.constant 0 : i32
    %c0_i32_1 = arith.constant 0 : i32
    return %c0_i32, %c0_i32_0 : i32, i32
  }
}

</mosaic_0001>

<llo_original>
// kernel: tpu_custom_call.1
$region0: #{tpu_custom_call.1}
  #allocation0 [shape = 'u32[]', space=smem, size = 0x4, offset = 0x4, fixed_abs, tag = 'smem constant byte address 0x4 - core index']
  #allocation1 [shape = 'u32[144,128]{1,0:T(1,128)}', space=vmem, size = 0x12000, scoped, tag = 'internal scratch']
  #allocation2 [shape = 'f32[8,128]{1,0:T(8,128)}', space=vmem, size = 0x1000, scoped, tag = 'scratch operand']
  #allocation3 [shape = 'f32[1]{0:T(128)S(6)}', space=smem, size = 0x200, scoped, tag = 'scoped memory for tpu_custom_call.1']
  %s0 = inlined_call_operand.<no memory space> [shape: f32[1], index: 0, kind: input, shape index: {}]
  %s1 = inlined_call_operand.hbm [shape: f32[20,128], index: 1, kind: input, shape index: {}]
  %s2 = inlined_call_operand.hbm [shape: f32[8,32], index: 2, kind: input, shape index: {}]
  %s3 = inlined_call_operand.vmem [shape: bf16[16,48], index: 3, kind: input, shape index: {}]
  %s4 = inlined_call_operand.hbm [shape: f32[1,1], index: 4, kind: output, shape index: {}]
  %s5 = sld [smem:[#allocation0]]
  $region77: #{tpu_custom_call.1} parent=0
    _
  %s7 = ssub.s32 1, %s5
  %s8 = scalar_select 0, %s7, %s5
  %9 = sst [smem:[#allocation3]] %s0
  $region1: #{tpu_custom_call.1} parent=0
    #allocation4 [shape = 'u8[8192]{0}', space=vmem, size = 0x2000, scoped, tag = 'input window, operand 1']
    #allocation5 [shape = 's32[2]{0}', space=sflag, size = 0x8, scoped, tag = 'scoped memory for tpu_custom_call.1']
    #allocation6 [shape = 's32[2]{0}', space=sflag, size = 0x8, scoped, tag = 'scoped memory for tpu_custom_call.1']
    #allocation7 [shape = 'u8[8192]{0}', space=vmem, size = 0x2000, scoped, tag = 'input window, operand 2']
    #allocation8 [shape = 's32[2]{0}', space=sflag, size = 0x8, scoped, tag = 'scoped memory for tpu_custom_call.1']
    #allocation9 [shape = 'u8[512]{0}', space=vmem, size = 0x400, scoped, tag = 'output window, operand 0, single buffered']
    %10 = vsyncpa [#allocation5], 0
    %s11 = scalar_lea.sflag [#allocation5], 1
    %12 = vsyncpa %s11, 0
    %13 = vsyncpa [#allocation8], 0
    %s14 = scalar_lea.sflag [#allocation8], 1
    %15 = vsyncpa %s14, 0
    %16 = vsyncpa [#allocation6], 0
    loop: start=0, step=1, limit=7
    $region2: #{tpu_custom_call.1} parent=1 // loop_pre_header
      _
    $region3: #{tpu_custom_call.1} parent=1 // loop_header
      %s18 = sphi 0, %s22
      %p19 = scmp.ge.s32.totalorder %s18, 7
      %s26 = sphi 0, %s26
      %s28 = sphi 0, %s26
      %s29 = sphi 0, %s28
      %s43 = sphi 0, %s29
      %s57 = sphi 0, %s59
      %s60 = sphi 0, %s57
      %s61 = sphi 0, %s60
      %s77 = sphi 0, %s61
      %s93 = sphi 0, %s95
      %s96 = sphi 0, %s93
      %s97 = sphi 0, %s96
      %s113 = sphi 0, %s97
      %s129 = sphi 0, %s131
      %s132 = sphi 0, %s129
      %s133 = sphi 0, %s132
      %s149 = sphi 0, %s133
      %s153 = sphi 0, %s153
      %s155 = sphi 0, %s153
      %s156 = sphi 0, %s155
      %s170 = sphi 0, %s156
    $region4: #{tpu_custom_call.1} parent=1 // loop_header_branch
      %21 = sbr.rel (%p19) target = $region8
    $region5: #{tpu_custom_call.1} parent=1 // loop_body
      %s23 = ssub.s32 %s18, 1
      %s24 = ssub.s32 %s18, 2
      %s25 = sadd.s32 %s18, 1
      %s27 = sadd.s32 %s26, 1
      %p30 = scmp.eq.s32.totalorder %s18, 4
      %p31 = scmp.ne.s32.totalorder %s26, %s28
      %p32 = scmp.eq.s32.totalorder %s18, 0
      %p33 = por %p31, %p32
      %p34 = scmp.ne.s32.totalorder %s26, %s28
      %p35 = scmp.eq.s32.totalorder %s23, 4
      %p36 = por %p34, %p35
      %p37 = scmp.ne.s32.totalorder %s28, %s29
      %p38 = scmp.eq.s32.totalorder %s23, 0
      %p39 = por %p37, %p38
      %p40 = scmp.ne.s32.totalorder %s28, %s29
      %p41 = scmp.eq.s32.totalorder %s24, 4
      %p42 = por %p40, %p41
      %p44 = scmp.ne.s32.totalorder %s29, %s43
      %p45 = scmp.eq.s32.totalorder %s24, 0
      %p46 = por %p44, %p45
      %p47 = scmp.gt.s32.totalorder %s18, 0
      %s48 = scalar_select %p47, %s18, 0
      %p49 = scmp.lt.s32.totalorder %s48, 2
      %s50 = scalar_select %p49, %s48, 2
      %p51 = scmp.gt.s32.totalorder %s25, 0
      %s52 = scalar_select %p51, %s25, 0
      %p53 = scmp.lt.s32.totalorder %s52, 2
      %s54 = scalar_select %p53, %s52, 2
      %s55 = ssub.s32 %s50, %s54
      %p56 = scmp.eq.s32.totalorder %s55, 0
      %s58 = sadd.s32 %s57, 1
      %s59 = scalar_select %p56, %s57, %s58
      %p62 = pneg %p56
      %p63 = scmp.eq.s32.totalorder %s18, 4
      %p64 = por %p62, %p63
      %p65 = scmp.ne.s32.totalorder %s57, %s60
      %p66 = scmp.eq.s32.totalorder %s18, 0
      %p67 = por %p65, %p66
      %p68 = scmp.ne.s32.totalorder %s57, %s60
      %p69 = scmp.eq.s32.totalorder %s23, 4
      %p70 = por %p68, %p69
      %p71 = scmp.ne.s32.totalorder %s60, %s61
      %p72 = scmp.eq.s32.totalorder %s23, 0
      %p73 = por %p71, %p72
      %p74 = scmp.ne.s32.totalorder %s60, %s61
      %p75 = scmp.eq.s32.totalorder %s24, 4
      %p76 = por %p74, %p75
      %p78 = scmp.ne.s32.totalorder %s61, %s77
      %p79 = scmp.eq.s32.totalorder %s24, 0
      %p80 = por %p78, %p79
      %s81 = ssub.s32 %s18, 3
      %p82 = scmp.gt.s32.totalorder %s81, 0
      %s83 = scalar_select %p82, %s81, 0
      %p84 = scmp.lt.s32.totalorder %s83, 0
      %s85 = scalar_select %p84, %s83, 0
      %s86 = ssub.s32 %s25, 3
      %p87 = scmp.gt.s32.totalorder %s86, 0
      %s88 = scalar_select %p87, %s86, 0
      %p89 = scmp.lt.s32.totalorder %s88, 0
      %s90 = scalar_select %p89, %s88, 0
      %s91 = ssub.s32 %s85, %s90
      %p92 = scmp.eq.s32.totalorder %s91, 0
      %s94 = sadd.s32 %s93, 1
      %s95 = scalar_select %p92, %s93, %s94
      %p98 = pneg %p92
      %p99 = scmp.eq.s32.totalorder %s18, 4
      %p100 = por %p98, %p99
      %p101 = scmp.ne.s32.totalorder %s93, %s96
      %p102 = scmp.eq.s32.totalorder %s18, 0
      %p103 = por %p101, %p102
      %p104 = scmp.ne.s32.totalorder %s93, %s96
      %p105 = scmp.eq.s32.totalorder %s23, 4
      %p106 = por %p104, %p105
      %p107 = scmp.ne.s32.totalorder %s96, %s97
      %p108 = scmp.eq.s32.totalorder %s23, 0
      %p109 = por %p107, %p108
      %p110 = scmp.ne.s32.totalorder %s96, %s97
      %p111 = scmp.eq.s32.totalorder %s24, 4
      %p112 = por %p110, %p111
      %p114 = scmp.ne.s32.totalorder %s97, %s113
      %p115 = scmp.eq.s32.totalorder %s24, 0
      %p116 = por %p114, %p115
      %s117 = ssub.s32 %s18, 4
      %p118 = scmp.gt.s32.totalorder %s117, 0
      %s119 = scalar_select %p118, %s117, 0
      %p120 = scmp.lt.s32.totalorder %s119, 0
      %s121 = scalar_select %p120, %s119, 0
      %s122 = ssub.s32 %s25, 4
      %p123 = scmp.gt.s32.totalorder %s122, 0
      %s124 = scalar_select %p123, %s122, 0
      %p125 = scmp.lt.s32.totalorder %s124, 0
      %s126 = scalar_select %p125, %s124, 0
      %s127 = ssub.s32 %s121, %s126
      %p128 = scmp.eq.s32.totalorder %s127, 0
      %s130 = sadd.s32 %s129, 1
      %s131 = scalar_select %p128, %s129, %s130
      %p134 = pneg %p128
      %p135 = scmp.eq.s32.totalorder %s18, 4
      %p136 = por %p134, %p135
      %p137 = scmp.ne.s32.totalorder %s129, %s132
      %p138 = scmp.eq.s32.totalorder %s18, 0
      %p139 = por %p137, %p138
      %p140 = scmp.ne.s32.totalorder %s129, %s132
      %p141 = scmp.eq.s32.totalorder %s23, 4
      %p142 = por %p140, %p141
      %p143 = scmp.ne.s32.totalorder %s132, %s133
      %p144 = scmp.eq.s32.totalorder %s23, 0
      %p145 = por %p143, %p144
      %p146 = scmp.ne.s32.totalorder %s132, %s133
      %p147 = scmp.eq.s32.totalorder %s24, 4
      %p148 = por %p146, %p147
      %p150 = scmp.ne.s32.totalorder %s133, %s149
      %p151 = scmp.eq.s32.totalorder %s24, 0
      %p152 = por %p150, %p151
      %s154 = sadd.s32 %s153, 1
      %p157 = scmp.eq.s32.totalorder %s18, 4
      %p158 = scmp.ne.s32.totalorder %s153, %s155
      %p159 = scmp.eq.s32.totalorder %s18, 0
      %p160 = por %p158, %p159
      %p161 = scmp.ne.s32.totalorder %s153, %s155
      %p162 = scmp.eq.s32.totalorder %s23, 4
      %p163 = por %p161, %p162
      %p164 = scmp.ne.s32.totalorder %s155, %s156
      %p165 = scmp.eq.s32.totalorder %s23, 0
      %p166 = por %p164, %p165
      %p167 = scmp.ne.s32.totalorder %s155, %s156
      %p168 = scmp.eq.s32.totalorder %s24, 4
      %p169 = por %p167, %p168
      %p171 = scmp.ne.s32.totalorder %s156, %s170
      %p172 = scmp.eq.s32.totalorder %s24, 0
      %p173 = por %p171, %p172
      %p174 = scmp.le.s32.totalorder 1, %s18
      %p175 = scmp.lt.s32.totalorder %s18, 6
      %p176 = pnand %p174, %p175
      %p177 = pneg %p176
      // Predicated region
      $region9: #{tpu_custom_call.1} parent=5 // pred_check
        _
      $region10: #{tpu_custom_call.1} parent=5 // pred_check_branch
        %179 = sbr.rel (%p176) target = $region12
      $region11: #{tpu_custom_call.1} parent=5 // pred_region
        %s180 = ssub.s32 %s18, 1
        // Predicated region
        $region13: #{tpu_custom_call.1} parent=11 // pred_check
          %p181 = pneg %p39
        $region14: #{tpu_custom_call.1} parent=11 // pred_check_branch
          %183 = sbr.rel (%p181) target = $region16
        $region15: #{tpu_custom_call.1} parent=11 // pred_region
          _
        $region16: #{tpu_custom_call.1} parent=11 // pred_fallthru
          _
      $region12: #{tpu_custom_call.1} parent=5 // pred_fallthru
        _
      %p184 = scmp.lt.s32.totalorder %s18, 5
      // Predicated region
      $region17: #{tpu_custom_call.1} parent=5 // pred_check
        %p185 = pneg %p184
      $region18: #{tpu_custom_call.1} parent=5 // pred_check_branch
        %187 = sbr.rel (%p185) target = $region20
      $region19: #{tpu_custom_call.1} parent=5 // pred_region
        // Predicated region
        $region21: #{tpu_custom_call.1} parent=19 // pred_check
          %p188 = pneg %p67
        $region22: #{tpu_custom_call.1} parent=19 // pred_check_branch
          %190 = sbr.rel (%p188) target = $region24
        $region23: #{tpu_custom_call.1} parent=19 // pred_region
          %s191 = sand.u32 %s57, 1
          %s192 = scalar_lea.sflag [#allocation5], %s191
          %s193 = sand.u32 %s57, 1
          %s194 = smul.addr %s193, 8
          %s195 = scalar_lea.vmem [#allocation4], %s194
          %p196 = scmp.gt.s32.totalorder %s18, 0
          %s197 = scalar_select %p196, %s18, 0
          %p198 = scmp.lt.s32.totalorder %s197, 2
          %s199 = scalar_select %p198, %s197, 2
          %s201 = ssub.s32 128, 128
          %202 = vsyncadd %s192, %s201
          %s203 = smul.addr %s199, 128
          %s204 = scalar_lea.hbm %s1, %s203
          %s206 = sshll.u32 %s195, 4
          %s207 = int_to_ptr.vmem [resolvable:$true] %s206
          %209 = dma.hbm_to_vmem [thread:$0]  %s204, 128, %s207, %s192
        $region24: #{tpu_custom_call.1} parent=19 // pred_fallthru
          _
        // Predicated region
        $region25: #{tpu_custom_call.1} parent=19 // pred_check
          %p210 = pneg %p103
        $region26: #{tpu_custom_call.1} parent=19 // pred_check_branch
          %212 = sbr.rel (%p210) target = $region28
        $region27: #{tpu_custom_call.1} parent=19 // pred_region
          %s213 = sand.u32 %s93, 1
          %s214 = scalar_lea.sflag [#allocation8], %s213
          %s215 = sand.u32 %s93, 1
          %s216 = smul.addr %s215, 8
          %s217 = scalar_lea.vmem [#allocation7], %s216
          %s218 = ssub.s32 %s18, 3
          %p219 = scmp.gt.s32.totalorder %s218, 0
          %s220 = scalar_select %p219, %s218, 0
          %p221 = scmp.lt.s32.totalorder %s220, 0
          %s222 = scalar_select %p221, %s220, 0
          %s224 = ssub.s32 128, 128
          %225 = vsyncadd %s214, %s224
          %s226 = smul.addr %s222, 128
          %s227 = scalar_lea.hbm %s2, %s226
          %s229 = sshll.u32 %s217, 4
          %s230 = int_to_ptr.vmem [resolvable:$true] %s229
          %232 = dma.hbm_to_vmem [thread:$0]  %s227, 128, %s230, %s214
        $region28: #{tpu_custom_call.1} parent=19 // pred_fallthru
          _
        // Predicated region
        $region29: #{tpu_custom_call.1} parent=19 // pred_check
          %p233 = pneg %p139
        $region30: #{tpu_custom_call.1} parent=19 // pred_check_branch
          %235 = sbr.rel (%p233) target = $region32
        $region31: #{tpu_custom_call.1} parent=19 // pred_region
          %s236 = ssub.s32 %s18, 4
          %p237 = scmp.gt.s32.totalorder %s236, 0
          %s238 = scalar_select %p237, %s236, 0
          %p239 = scmp.lt.s32.totalorder %s238, 0
          %s240 = scalar_select %p239, %s238, 0
          %s241 = smul.u32 2, %s240
          %p242 = scmp.lt.s32.totalorder %s241, 1
          %s243 = scalar_select %p242, %s241, 1
          %s244 = smul.addr %s243, 4
          %s245 = scalar_lea.vmem %s3, %s244
          %s246 = ssub.s32 %s18, 4
          %p247 = scmp.gt.s32.totalorder %s246, 0
          %s248 = scalar_select %p247, %s246, 0
          %p249 = scmp.lt.s32.totalorder %s248, 0
          %s250 = scalar_select %p249, %s248, 0
          %s251 = smul.u32 2, %s250
        $region32: #{tpu_custom_call.1} parent=19 // pred_fallthru
          _
      $region20: #{tpu_custom_call.1} parent=5 // pred_fallthru
        _
      %p252 = scmp.le.s32.totalorder 1, %s18
      %p253 = scmp.lt.s32.totalorder %s18, 6
      %p254 = pnand %p252, %p253
      %p255 = pneg %p254
      // Predicated region
      $region33: #{tpu_custom_call.1} parent=5 // pred_check
        _
      $region34: #{tpu_custom_call.1} parent=5 // pred_check_branch
        %257 = sbr.rel (%p254) target = $region36
      $region35: #{tpu_custom_call.1} parent=5 // pred_region
        %s258 = ssub.s32 %s18, 1
        %s259 = sand.u32 %s60, 1
        %s260 = scalar_lea.sflag [#allocation5], %s259
        %s261 = sand.u32 %s60, 1
        %s262 = smul.addr %s261, 8
        %s263 = scalar_lea.vmem [#allocation4], %s262
        // Predicated region
        $region37: #{tpu_custom_call.1} parent=35 // pred_check
          %p264 = pneg %p73
        $region38: #{tpu_custom_call.1} parent=35 // pred_check_branch
          %266 = sbr.rel (%p264) target = $region40
        $region39: #{tpu_custom_call.1} parent=35 // pred_region
          %267 = dma.done %s260, 128
        $region40: #{tpu_custom_call.1} parent=35 // pred_fallthru
          _
        %s268 = sand.u32 %s96, 1
        %s269 = scalar_lea.sflag [#allocation8], %s268
        %s270 = sand.u32 %s96, 1
        %s271 = smul.addr %s270, 8
        %s272 = scalar_lea.vmem [#allocation7], %s271
        // Predicated region
        $region41: #{tpu_custom_call.1} parent=35 // pred_check
          %p273 = pneg %p109
        $region42: #{tpu_custom_call.1} parent=35 // pred_check_branch
          %275 = sbr.rel (%p273) target = $region44
        $region43: #{tpu_custom_call.1} parent=35 // pred_region
          %276 = dma.done %s269, 128
        $region44: #{tpu_custom_call.1} parent=35 // pred_fallthru
          _
        %p277 = pneg %p39
        %p278 = pneg %p36
        %s279 = sand.u32 %s60, 1
        %s280 = scalar_lea.sflag [#allocation5], %s279
        %s281 = sand.u32 %s60, 1
        %s282 = smul.addr %s281, 8
        %s283 = scalar_lea.vmem [#allocation4], %s282
        %p284 = pneg %p73
        %p285 = pneg %p70
        %s286 = sand.u32 %s96, 1
        %s287 = scalar_lea.sflag [#allocation8], %s286
        %s288 = sand.u32 %s96, 1
        %s289 = smul.addr %s288, 8
        %s290 = scalar_lea.vmem [#allocation7], %s289
        %p291 = pneg %p109
        %p292 = pneg %p106
        %s293 = ssub.s32 %s23, 4
        %p294 = scmp.gt.s32.totalorder %s293, 0
        %s295 = scalar_select %p294, %s293, 0
        %p296 = scmp.lt.s32.totalorder %s295, 0
        %s297 = scalar_select %p296, %s295, 0
        %s298 = smul.u32 2, %s297
        %p299 = scmp.lt.s32.totalorder %s298, 1
        %s300 = scalar_select %p299, %s298, 1
        %s301 = smul.addr %s300, 4
        %s302 = scalar_lea.vmem %s3, %s301
        %p303 = pneg %p145
        %p304 = pneg %p142
        %p305 = pneg %p166
        %p306 = pneg %p163
        %p307 = scmp.gt.s32.totalorder %s23, 0
        %s308 = scalar_select %p307, %s23, 0
        %p309 = scmp.lt.s32.totalorder %s308, 2
        %s310 = scalar_select %p309, %s308, 2
        %s311 = ssub.s32 %s23, 3
        %p312 = scmp.gt.s32.totalorder %s311, 0
        %s313 = scalar_select %p312, %s311, 0
        %p314 = scmp.lt.s32.totalorder %s313, 0
        %s315 = scalar_select %p314, %s313, 0
        %s316 = ssub.s32 %s23, 4
        %p317 = scmp.gt.s32.totalorder %s316, 0
        %s318 = scalar_select %p317, %s316, 0
        %p319 = scmp.lt.s32.totalorder %s318, 0
        %s320 = scalar_select %p319, %s318, 0
        %s321 = smul.u32 2, %s320
        %p322 = scmp.lt.s32.totalorder %s321, 1
        %s323 = scalar_select %p322, %s321, 1
        %s324 = smul.addr %s323, 4
        %s325 = scalar_lea.vmem %s3, %s324
        %s326 = ssub.s32 %s23, 4
        %p327 = scmp.gt.s32.totalorder %s326, 0
        %s328 = scalar_select %p327, %s326, 0
        %p329 = scmp.lt.s32.totalorder %s328, 0
        %s330 = scalar_select %p329, %s328, 0
        %s331 = smul.u32 2, %s330
        %p332 = scmp.eq.s32.totalorder %s23, 0
        // Predicated region
        $region45: #{tpu_custom_call.1} parent=35 // pred_check
          %p333 = pneg %p332
        $region46: #{tpu_custom_call.1} parent=35 // pred_check_branch
          %335 = sbr.rel (%p333) target = $region48
        $region47: #{tpu_custom_call.1} parent=35 // pred_region
          %336 = vst [vmem:[#allocation2] sm:$0xff] 0.0
        $region48: #{tpu_custom_call.1} parent=35 // pred_fallthru
          _
        %v337 = vlaneseq
        %v338 = vshrl.u32 %v337, 7
        %v339 = vlaneseq
        %v340 = vand.u32 %v339, 127
        %p341 = scmp.ge.s32.totalorder %s23, 0
        %p342 = scmp.lt.s32.totalorder %s23, 3
        %p343 = pnand %p341, %p342
        %p344 = pneg %p343
        // Predicated region
        $region49: #{tpu_custom_call.1} parent=35 // pred_check
          _
        $region50: #{tpu_custom_call.1} parent=35 // pred_check_branch
          %346 = sbr.rel (%p343) target = $region52
        $region51: #{tpu_custom_call.1} parent=35 // pred_region
          %v347 = vld [vmem:[%s263] sm:$0xff]
          %s348 = smul.u32 %s23, 8
          %s349 = ssub.s32 20, %s348
          %p350 = scmp.lt.s32.totalorder %s349, 8
          %s351 = scalar_select %p350, %s349, 8
          %v352 = vstv %s351
          %vm353 = vcmp.lt.s32.totalorder %v338, %v352
          %v354 = vsel %vm353, %v347, 0.0
          %v355 = vmul.f32 %v354, %v354
          %356 = vadd.xlane.f32.xlu0 %v355
          %v357 = vpop.xlane.xlu0 %356
          %v358 = vrot.slane %v357, 4
          %v359 = vadd.f32 %v357, %v358
          %v360 = vrot.slane %v359, 2
          %v361 = vadd.f32 %v359, %v360
          %v362 = vrot.slane %v361, 1
          %v363 = vadd.f32 %v361, %v362
          %s364 = vtos %v363
          %vm365 = vcmp.eq.s32.totalorder %v338, 0
          %vm366 = vcmp.eq.s32.totalorder %v340, 0
          %vm367 = vmand %vm365, %vm366
          %v368 = vld [vmem:[#allocation2] sm:$0xff]
          %v369 = vstv %s364
          %v370 = vsel %vm367, %v369, 0.0
          %v371 = vadd.f32 %v368, %v370
          %372 = vst [vmem:[#allocation2] sm:$0xff] %v371
        $region52: #{tpu_custom_call.1} parent=35 // pred_fallthru
          _
        %p373 = scmp.ge.s32.totalorder %s23, 3
        %p374 = scmp.lt.s32.totalorder %s23, 4
        %p375 = pnand %p373, %p374
        %p376 = pneg %p375
        // Predicated region
        $region53: #{tpu_custom_call.1} parent=35 // pred_check
          _
        $region54: #{tpu_custom_call.1} parent=35 // pred_check_branch
          %378 = sbr.rel (%p375) target = $region56
        $region55: #{tpu_custom_call.1} parent=35 // pred_region
          %v379 = vld [vmem:[%s272] sm:$0xff]
          %v380 = vmul.f32 %v379, %v379
          %vm381 = vcmask 261120
          %v382 = vsel %vm381, %v380, 0.0
          %383 = vadd.xlane.f32.xlu0 %v382
          %v384 = vpop.xlane.xlu0 %383
          %v385 = vrot.slane %v384, 4
          %v386 = vadd.f32 %v384, %v385
          %v387 = vrot.slane %v386, 2
          %v388 = vadd.f32 %v386, %v387
          %v389 = vrot.slane %v388, 1
          %v390 = vadd.f32 %v388, %v389
          %s391 = vtos %v390
          %vm392 = vcmp.eq.s32.totalorder %v338, 1
          %vm393 = vcmp.eq.s32.totalorder %v340, 0
          %vm394 = vmand %vm392, %vm393
          %v395 = vld [vmem:[#allocation2] sm:$0xff]
          %v396 = vstv %s391
          %v397 = vsel %vm394, %v396, 0.0
          %v398 = vadd.f32 %v395, %v397
          %399 = vst [vmem:[#allocation2] sm:$0xff] %v398
        $region56: #{tpu_custom_call.1} parent=35 // pred_fallthru
          _
        %p400 = scmp.ge.s32.totalorder %s23, 4
        %p401 = scmp.lt.s32.totalorder %s23, 5
        %p402 = pnand %p400, %p401
        %p403 = pneg %p402
        // Predicated region
        $region57: #{tpu_custom_call.1} parent=35 // pred_check
          _
        $region58: #{tpu_custom_call.1} parent=35 // pred_check_branch
          %405 = sbr.rel (%p402) target = $region60
        $region59: #{tpu_custom_call.1} parent=35 // pred_region
          %v406 = vld [vmem:[%s325] sm:$0xf]
          %v407 = vld [vmem:[%s325 + $0x4] sm:$0xf]
          %v408 = vunpack.c.l.bf16 %v406
          %v409 = vunpack.c.l.bf16 %v407
          %v410 = vmul.f32 %v408, %v408
          %v411 = vmul.f32 %v409, %v409
          %vm412 = vcmask 392192
          %v413 = vsel %vm412, %v410, 0.0
          %v414 = vsel %vm412, %v411, 0.0
          %v415 = vadd.f32 %v413, %v414
          %416 = vadd.xlane.f32.xlu0 %v415
          %v417 = vpop.xlane.xlu0 %416
          %v418 = vrot.slane %v417, 4
          %v419 = vadd.f32 %v417, %v418
          %v420 = vrot.slane %v419, 2
          %v421 = vadd.f32 %v419, %v420
          %v422 = vrot.slane %v421, 1
          %v423 = vadd.f32 %v421, %v422
          %s424 = vtos %v423
          %vm425 = vcmp.eq.s32.totalorder %v338, 2
          %vm426 = vcmp.eq.s32.totalorder %v340, 0
          %vm427 = vmand %vm425, %vm426
          %v428 = vld [vmem:[#allocation2] sm:$0xff]
          %v429 = vstv %s424
          %v430 = vsel %vm427, %v429, 0.0
          %v431 = vadd.f32 %v428, %v430
          %432 = vst [vmem:[#allocation2] sm:$0xff] %v431
        $region60: #{tpu_custom_call.1} parent=35 // pred_fallthru
          _
        %p433 = scmp.eq.s32.totalorder %s23, 4
        // Predicated region
        $region61: #{tpu_custom_call.1} parent=35 // pred_check
          %p434 = pneg %p433
        $region62: #{tpu_custom_call.1} parent=35 // pred_check_branch
          %436 = sbr.rel (%p434) target = $region64
        $region63: #{tpu_custom_call.1} parent=35 // pred_region
          %v437 = vld [vmem:[#allocation2] sm:$0xff]
          %438 = vadd.xlane.f32.xlu0 %v437
          %v439 = vpop.xlane.xlu0 %438
          %v440 = vrsqrt.pop %v439
          %v441 = vmul.f32 %v439, %v440
          %vm442 = vcmp.eq.f32.partialorder %v439, inf
          %v443 = vsel %vm442, %v439, %v441
          %vm444 = vcmp.eq.f32.partialorder %v439, 0.0
          %v445 = vand.u32 %v439, 2147483648
          %v446 = vsel %vm444, %v445, %v443
          %s447 = sld [smem:[#allocation3]]
          %vm448 = vcmask 7168
          %v449 = vsel %vm448, %v446, 0.0
          %450 = vadd.xlane.f32.xlu0 %v449
          %v451 = vpop.xlane.xlu0 %450
          %v452 = vrot.slane %v451, 4
          %v453 = vadd.f32 %v451, %v452
          %v454 = vrot.slane %v453, 2
          %v455 = vadd.f32 %v453, %v454
          %v456 = vrot.slane %v455, 1
          %v457 = vadd.f32 %v455, %v456
          %s458 = vtos %v457
          %v459 = vstv %s458
          %v460 = vstv %s447
          %v461 = vmul.f32 %v460, %v459
          %vm462 = vcmask 0
          %463 = vst.msk [vmem:[#allocation9] sm:$0x1] %vm462, %v461
        $region64: #{tpu_custom_call.1} parent=35 // pred_fallthru
          _
        // Predicated region
        $region65: #{tpu_custom_call.1} parent=35 // pred_check
          %p464 = pneg %p163
        $region66: #{tpu_custom_call.1} parent=35 // pred_check_branch
          %466 = sbr.rel (%p464) target = $region68
        $region67: #{tpu_custom_call.1} parent=35 // pred_region
          %s468 = ssub.s32 16, 16
          %469 = vsyncadd [#allocation6], %s468
          %s471 = sshll.u32 [#allocation9], 4
          %s472 = int_to_ptr.vmem [resolvable:$true] %s471
          %474 = dma.vmem_to_hbm [thread:$0]  %s472, 16, %s4, [#allocation6]
        $region68: #{tpu_custom_call.1} parent=35 // pred_fallthru
          _
        // Predicated region
        $region69: #{tpu_custom_call.1} parent=35 // pred_check
          %p475 = pneg %p163
        $region70: #{tpu_custom_call.1} parent=35 // pred_check_branch
          %477 = sbr.rel (%p475) target = $region72
        $region71: #{tpu_custom_call.1} parent=35 // pred_region
          %478 = dma.done [#allocation6], 16
        $region72: #{tpu_custom_call.1} parent=35 // pred_fallthru
          _
      $region36: #{tpu_custom_call.1} parent=5 // pred_fallthru
        _
      %p479 = scmp.le.s32.totalorder 2, %s18
      // Predicated region
      $region73: #{tpu_custom_call.1} parent=5 // pred_check
        %p480 = pneg %p479
      $region74: #{tpu_custom_call.1} parent=5 // pred_check_branch
        %482 = sbr.rel (%p480) target = $region76
      $region75: #{tpu_custom_call.1} parent=5 // pred_region
        %s483 = ssub.s32 %s18, 2
      $region76: #{tpu_custom_call.1} parent=5 // pred_fallthru
        _
    $region6: #{tpu_custom_call.1} parent=1 // loop_footer
      %s22 = sadd.s32 1, %s18
    $region7: #{tpu_custom_call.1} parent=1 // loop_footer_branch
      %17 = sbr.rel target = $region3
    $region8: #{tpu_custom_call.1} parent=1 // loop_exit
      _
    %484 = vsyncpa [#allocation5], 1
    %s485 = scalar_lea.sflag [#allocation5], 1
    %486 = vsyncpa %s485, 1
    %487 = vsyncpa [#allocation8], 1
    %s488 = scalar_lea.sflag [#allocation8], 1
    %489 = vsyncpa %s488, 1
    %490 = vsyncpa [#allocation6], 1
    %s491 = scalar_lea.sflag [#allocation6], 1
    %492 = vsyncpa %s491, 1

</llo_original>
